<compile_context>
chip_gen: v7x
topology: tpu7x:2x2x1
jax: 0.10.0
libtpu: 0.0.40
codegen_flags: <defaults>
</compile_context>

<pallas_src>
import jax
import jax.numpy as jnp
from jax.experimental import pallas as pl
from jax.experimental.pallas import tpu as pltpu

H1, H2 = 1024, 256  # lane-aligned hidden widths (1000 -> 1024, 250 -> 256)


def _round_up(n, m):
    return ((n + m - 1) // m) * m


def mlp_kernel(x_ref, w1_ref, b1_ref, w2_ref, b2_ref, w3_ref, b3_ref, o_ref):
    # x / weights arrive in bf16; MXU accumulates in f32; elementwise work
    # (bias add + relu) stays in f32 on the VPU (no bf16 VPU on v5e).
    x = x_ref[...]
    h1 = jnp.dot(x, w1_ref[...], preferred_element_type=jnp.float32) + b1_ref[...]
    h1 = jnp.maximum(h1, 0.0)
    h2 = jnp.dot(h1.astype(jnp.bfloat16), w2_ref[...],
                 preferred_element_type=jnp.float32) + b2_ref[...]
    h2 = jnp.maximum(h2, 0.0)
    out = jnp.dot(h2.astype(jnp.bfloat16), w3_ref[...],
                  preferred_element_type=jnp.float32) + b3_ref[...]
    o_ref[...] = out.astype(o_ref.dtype)


def mlp_forward(x, params, num_classes):
    w1, b1, w2, b2, w3, b3 = params
    B, num_nodes = x.shape
    c_pad = w3.shape[1]

    # Small batch: one full-extent block (no divisibility constraint, no pad).
    # Large batch: tile the batch and mark it "parallel" so v7x's two
    # TensorCores split the work and x blocks are double-buffered.
    if B <= 256:
        tm, grid_m = B, 1
    else:
        tm, grid_m = 128, pl.cdiv(B, 128)

    x_bf16 = x.astype(jnp.bfloat16)

    out = pl.pallas_call(
        mlp_kernel,
        out_shape=jax.ShapeDtypeStruct((B, c_pad), jnp.float32),
        grid=(grid_m,),
        in_specs=[
            pl.BlockSpec((tm, num_nodes), lambda i: (i, 0)),
            pl.BlockSpec(w1.shape, lambda i: (0, 0)),
            pl.BlockSpec(b1.shape, lambda i: (0, 0)),
            pl.BlockSpec(w2.shape, lambda i: (0, 0)),
            pl.BlockSpec(b2.shape, lambda i: (0, 0)),
            pl.BlockSpec(w3.shape, lambda i: (0, 0)),
            pl.BlockSpec(b3.shape, lambda i: (0, 0)),
        ],
        out_specs=pl.BlockSpec((tm, c_pad), lambda i: (i, 0)),
        compiler_params=pltpu.CompilerParams(
            dimension_semantics=("parallel",)),
    )(x_bf16, w1, b1, w2, b2, w3, b3)
    # TODO(synk): if num_nodes grows beyond ~16K, tile the first matmul over K
    # (extra "arbitrary" grid axis + f32 accumulator scratch) so bf16 W1 still
    # fits v7x's 32 MiB scoped-VMEM default.
    return out[:, :num_classes]


def init_params(key, num_nodes, num_classes):
    """nn.Linear-style uniform init, zero-padded to lane-aligned widths.

    Weights stored as (in, out) bf16 so the kernel computes y = x @ W + b
    (== PyTorch x @ W.T with W of shape (out, in)). Biases stay f32.
    """
    c_pad = _round_up(max(num_classes, 128), 128)
    dims = [(num_nodes, 1000, num_nodes, H1),
            (1000, 250, H1, H2),
            (250, num_classes, H2, c_pad)]
    params = []
    for fan_in, fan_out, in_pad, out_pad in dims:
        key, kw, kb = jax.random.split(key, 3)
        bound = 1.0 / jnp.sqrt(fan_in)
        w = jax.random.uniform(kw, (fan_in, fan_out), jnp.float32, -bound, bound)
        b = jax.random.uniform(kb, (fan_out,), jnp.float32, -bound, bound)
        w_p = jnp.zeros((in_pad, out_pad), jnp.float32).at[:fan_in, :fan_out].set(w)
        b_p = jnp.zeros((1, out_pad), jnp.float32).at[0, :fan_out].set(b)
        params += [w_p.astype(jnp.bfloat16), b_p]
    return tuple(params)


def reference_forward_bf16(x, params, num_classes):
    """Pure-JAX mirror of the kernel's numerics (bf16 inputs, f32 accumulate)."""
    w1, b1, w2, b2, w3, b3 = params
    xb = x.astype(jnp.bfloat16)
    h1 = jnp.maximum(jnp.dot(xb, w1, preferred_element_type=jnp.float32) + b1, 0.0)
    h2 = jnp.maximum(jnp.dot(h1.astype(jnp.bfloat16), w2,
                             preferred_element_type=jnp.float32) + b2, 0.0)
    out = jnp.dot(h2.astype(jnp.bfloat16), w3,
                  preferred_element_type=jnp.float32) + b3
    return out[:, :num_classes]


def reference_forward_f32(x, params, num_classes):
    """Full-f32 reference (matches the PyTorch module's math)."""
    w1, b1, w2, b2, w3, b3 = params
    h1 = jnp.maximum(x @ w1.astype(jnp.float32) + b1, 0.0)
    h2 = jnp.maximum(h1 @ w2.astype(jnp.float32) + b2, 0.0)
    out = h2 @ w3.astype(jnp.float32) + b3
    return out[:, :num_classes]


if __name__ == "__main__":
    num_nodes, num_classes, batch = 32, 10, 2
    key = jax.random.PRNGKey(0)
    key, kx = jax.random.split(key)
    x = jax.random.normal(kx, (batch, num_nodes), jnp.float32)
    params = init_params(key, num_nodes, num_classes)

    out = mlp_forward(x, params, num_classes)
    jax.block_until_ready(out)
    assert out.shape == (batch, num_classes)

    # Tight check vs. a pure-JAX mirror of the kernel's bf16/f32 numerics.
    ref_bf16 = reference_forward_bf16(x, params, num_classes)
    assert jnp.allclose(out, ref_bf16, atol=1e-2, rtol=1e-2)

    # Loose check vs. the full-f32 PyTorch-equivalent forward.
    ref_f32 = reference_forward_f32(x, params, num_classes)
    assert jnp.allclose(out, ref_f32, atol=5e-2, rtol=5e-2)

    print("KERNEL_OK")
</pallas_src>

<mosaic_0001>
module attributes {stable_mosaic.version = 11 : i64} {
  func.func @mlp_kernel(%arg0: i32, %arg1: memref<2x32xbf16, #tpu.memory_space<vmem>>, %arg2: memref<32x1024xbf16, #tpu.memory_space<vmem>>, %arg3: memref<1x1024xf32, #tpu.memory_space<vmem>>, %arg4: memref<1024x256xbf16, #tpu.memory_space<vmem>>, %arg5: memref<1x256xf32, #tpu.memory_space<vmem>>, %arg6: memref<256x128xbf16, #tpu.memory_space<vmem>>, %arg7: memref<1x128xf32, #tpu.memory_space<vmem>>, %arg8: memref<2x128xf32, #tpu.memory_space<vmem>>) attributes {dimension_semantics = [#tpu.dimension_semantics<parallel>], iteration_bounds = array<i64: 1>, scalar_prefetch = 0 : i64, scratch_operands = 0 : i64, tpu.core_type = #tpu.core_type<tc>, window_params = [{transform_indices = @transform_0, window_bounds = array<i64: 2, 32>}, {pipeline_mode = #tpu.pipeline_mode<synchronous>, transform_indices = @transform_1, window_bounds = array<i64: 32, 1024>}, {pipeline_mode = #tpu.pipeline_mode<synchronous>, transform_indices = @transform_2, window_bounds = array<i64: 1, 1024>}, {pipeline_mode = #tpu.pipeline_mode<synchronous>, transform_indices = @transform_3, window_bounds = array<i64: 1024, 256>}, {pipeline_mode = #tpu.pipeline_mode<synchronous>, transform_indices = @transform_4, window_bounds = array<i64: 1, 256>}, {pipeline_mode = #tpu.pipeline_mode<synchronous>, transform_indices = @transform_5, window_bounds = array<i64: 256, 128>}, {pipeline_mode = #tpu.pipeline_mode<synchronous>, transform_indices = @transform_6, window_bounds = array<i64: 1, 128>}, {transform_indices = @transform_7, window_bounds = array<i64: 2, 128>}]} {
    %c0 = arith.constant 0 : index
    %c0_0 = arith.constant 0 : index
    %0 = vector.load %arg1[%c0, %c0_0] : memref<2x32xbf16, #tpu.memory_space<vmem>>, vector<2x32xbf16>
    %c0_1 = arith.constant 0 : index
    %c0_2 = arith.constant 0 : index
    %1 = vector.load %arg2[%c0_1, %c0_2] : memref<32x1024xbf16, #tpu.memory_space<vmem>>, vector<32x1024xbf16>
    %cst = arith.constant dense<0.000000e+00> : vector<2x1024xf32>
    %2 = tpu.matmul %0, %1, %cst {dimension_numbers = #tpu.dot_dimension_numbers<[1], [0], [0], [1], [0, 0, 1, 1], [], []>} : vector<2x32xbf16>, vector<32x1024xbf16>, vector<2x1024xf32> -> vector<2x1024xf32>
    %c0_3 = arith.constant 0 : index
    %c0_4 = arith.constant 0 : index
    %3 = vector.load %arg3[%c0_3, %c0_4] : memref<1x1024xf32, #tpu.memory_space<vmem>>, vector<1x1024xf32>
    %4 = vector.broadcast %3 : vector<1x1024xf32> to vector<2x1024xf32>
    %5 = arith.addf %2, %4 : vector<2x1024xf32>
    %cst_5 = arith.constant 0.000000e+00 : f32
    %6 = vector.broadcast %cst_5 : f32 to vector<2x1024xf32>
    %7 = arith.maximumf %5, %6 : vector<2x1024xf32>
    %8 = arith.truncf %7 : vector<2x1024xf32> to vector<2x1024xbf16>
    %c0_6 = arith.constant 0 : index
    %c0_7 = arith.constant 0 : index
    %9 = vector.load %arg4[%c0_6, %c0_7] : memref<1024x256xbf16, #tpu.memory_space<vmem>>, vector<1024x256xbf16>
    %cst_8 = arith.constant dense<0.000000e+00> : vector<2x256xf32>
    %10 = tpu.matmul %8, %9, %cst_8 {dimension_numbers = #tpu.dot_dimension_numbers<[1], [0], [0], [1], [0, 0, 1, 1], [], []>} : vector<2x1024xbf16>, vector<1024x256xbf16>, vector<2x256xf32> -> vector<2x256xf32>
    %c0_9 = arith.constant 0 : index
    %c0_10 = arith.constant 0 : index
    %11 = vector.load %arg5[%c0_9, %c0_10] : memref<1x256xf32, #tpu.memory_space<vmem>>, vector<1x256xf32>
    %12 = vector.broadcast %11 : vector<1x256xf32> to vector<2x256xf32>
    %13 = arith.addf %10, %12 : vector<2x256xf32>
    %cst_11 = arith.constant 0.000000e+00 : f32
    %14 = vector.broadcast %cst_11 : f32 to vector<2x256xf32>
    %15 = arith.maximumf %13, %14 : vector<2x256xf32>
    %16 = arith.truncf %15 : vector<2x256xf32> to vector<2x256xbf16>
    %c0_12 = arith.constant 0 : index
    %c0_13 = arith.constant 0 : index
    %17 = vector.load %arg6[%c0_12, %c0_13] : memref<256x128xbf16, #tpu.memory_space<vmem>>, vector<256x128xbf16>
    %cst_14 = arith.constant dense<0.000000e+00> : vector<2x128xf32>
    %18 = tpu.matmul %16, %17, %cst_14 {dimension_numbers = #tpu.dot_dimension_numbers<[1], [0], [0], [1], [0, 0, 1, 1], [], []>} : vector<2x256xbf16>, vector<256x128xbf16>, vector<2x128xf32> -> vector<2x128xf32>
    %c0_15 = arith.constant 0 : index
    %c0_16 = arith.constant 0 : index
    %19 = vector.load %arg7[%c0_15, %c0_16] : memref<1x128xf32, #tpu.memory_space<vmem>>, vector<1x128xf32>
    %20 = vector.broadcast %19 : vector<1x128xf32> to vector<2x128xf32>
    %21 = arith.addf %18, %20 : vector<2x128xf32>
    %c0_17 = arith.constant 0 : index
    %c0_18 = arith.constant 0 : index
    %22 = vector.load %arg8[%c0_17, %c0_18] : memref<2x128xf32, #tpu.memory_space<vmem>>, vector<2x128xf32>
    tpu.vector_store %arg8[%c0_17, %c0_18], %21 {strides = array<i32>} : memref<2x128xf32, #tpu.memory_space<vmem>>, vector<2x128xf32>,
    return
  }
  func.func @transform_0(%arg0: i32) -> (i32, i32) {
    %c0_i32 = arith.constant 0 : i32
    %c0_i32_0 = arith.constant 0 : i32
    return %arg0, %c0_i32 : i32, i32
  }
  func.func @transform_1(%arg0: i32) -> (i32, i32) {
    %c0_i32 = arith.constant 0 : i32
    %c0_i32_0 = arith.constant 0 : i32
    %c0_i32_1 = arith.constant 0 : i32
    return %c0_i32, %c0_i32_0 : i32, i32
  }
  func.func @transform_2(%arg0: i32) -> (i32, i32) {
    %c0_i32 = arith.constant 0 : i32
    %c0_i32_0 = arith.constant 0 : i32
    %c0_i32_1 = arith.constant 0 : i32
    return %c0_i32, %c0_i32_0 : i32, i32
  }
  func.func @transform_3(%arg0: i32) -> (i32, i32) {
    %c0_i32 = arith.constant 0 : i32
    %c0_i32_0 = arith.constant 0 : i32
    %c0_i32_1 = arith.constant 0 : i32
    return %c0_i32, %c0_i32_0 : i32, i32
  }
  func.func @transform_4(%arg0: i32) -> (i32, i32) {
    %c0_i32 = arith.constant 0 : i32
    %c0_i32_0 = arith.constant 0 : i32
    %c0_i32_1 = arith.constant 0 : i32
    return %c0_i32, %c0_i32_0 : i32, i32
  }
  func.func @transform_5(%arg0: i32) -> (i32, i32) {
    %c0_i32 = arith.constant 0 : i32
    %c0_i32_0 = arith.constant 0 : i32
    %c0_i32_1 = arith.constant 0 : i32
    return %c0_i32, %c0_i32_0 : i32, i32
  }
  func.func @transform_6(%arg0: i32) -> (i32, i32) {
    %c0_i32 = arith.constant 0 : i32
    %c0_i32_0 = arith.constant 0 : i32
    %c0_i32_1 = arith.constant 0 : i32
    return %c0_i32, %c0_i32_0 : i32, i32
  }
  func.func @transform_7(%arg0: i32) -> (i32, i32) {
    %c0_i32 = arith.constant 0 : i32
    %c0_i32_0 = arith.constant 0 : i32
    return %arg0, %c0_i32 : i32, i32
  }
}

</mosaic_0001>

<llo_original>
// kernel: tpu_custom_call.1
$region0: #{tpu_custom_call.1}
  #allocation0 [shape = 'u32[]', space=smem, size = 0x4, offset = 0x4, fixed_abs, tag = 'smem constant byte address 0x4 - core index']
  #allocation1 [shape = 'u32[144,128]{1,0:T(1,128)}', space=vmem, size = 0x12000, scoped, tag = 'internal scratch']
  %s0 = inlined_call_operand.hbm [shape: bf16[2,32], index: 0, kind: input, shape index: {}]
  %s1 = inlined_call_operand.hbm [shape: bf16[32,1024], index: 1, kind: input, shape index: {}]
  %s2 = inlined_call_operand.hbm [shape: f32[1,1024], index: 2, kind: input, shape index: {}]
  %s3 = inlined_call_operand.hbm [shape: bf16[1024,256], index: 3, kind: input, shape index: {}]
  %s4 = inlined_call_operand.vmem [shape: f32[1,256], index: 4, kind: input, shape index: {}]
  %s5 = inlined_call_operand.hbm [shape: bf16[256,128], index: 5, kind: input, shape index: {}]
  %s6 = inlined_call_operand.vmem [shape: f32[1,128], index: 6, kind: input, shape index: {}]
  %s7 = inlined_call_operand.hbm [shape: f32[2,128], index: 7, kind: output, shape index: {}]
  %s8 = sld [smem:[#allocation0]]
  $region58: #{tpu_custom_call.1} parent=0
    _
  %s10 = ssub.s32 1, %s8
  %s11 = scalar_select 0, %s10, %s8
  $region1: #{tpu_custom_call.1} parent=0
    #allocation2 [shape = 'u8[512]{0}', space=vmem, size = 0x400, scoped, tag = 'input window, operand 0, single buffered']
    #allocation3 [shape = 's32[1]{0}', space=sflag, size = 0x4, scoped, tag = 'scoped memory for tpu_custom_call.1']
    #allocation4 [shape = 's32[1]{0}', space=sflag, size = 0x4, scoped, tag = 'scoped memory for tpu_custom_call.1']
    #allocation5 [shape = 'u8[65536]{0}', space=vmem, size = 0x10000, scoped, tag = 'input window, operand 1, single buffered']
    #allocation6 [shape = 's32[1]{0}', space=sflag, size = 0x4, scoped, tag = 'scoped memory for tpu_custom_call.1']
    #allocation7 [shape = 'u8[4096]{0}', space=vmem, size = 0x1000, scoped, tag = 'input window, operand 2, single buffered']
    #allocation8 [shape = 'u8[524288]{0}', space=vmem, size = 0x80000, scoped, tag = 'input window, operand 3, single buffered']
    #allocation9 [shape = 's32[1]{0}', space=sflag, size = 0x4, scoped, tag = 'scoped memory for tpu_custom_call.1']
    #allocation10 [shape = 'u8[65536]{0}', space=vmem, size = 0x10000, scoped, tag = 'input window, operand 5, single buffered']
    #allocation11 [shape = 'u8[1024]{0}', space=vmem, size = 0x400, scoped, tag = 'output window, operand 0, single buffered']
    %12 = vsyncpa [#allocation3], 0
    %13 = vsyncpa [#allocation6], 0
    %14 = vsyncpa [#allocation9], 0
    %15 = vsyncpa [#allocation4], 0
    // Predicated region
    $region2: #{tpu_custom_call.1} parent=1 // pred_check
      _
    $region3: #{tpu_custom_call.1} parent=1 // pred_check_branch
      %17 = sbr.rel (0) target = $region5
    $region4: #{tpu_custom_call.1} parent=1 // pred_region
      %s19 = ssub.s32 16, 16
      %20 = vsyncadd [#allocation3], %s19
      %s22 = sshll.u32 [#allocation2], 4
      %s23 = int_to_ptr.vmem [resolvable:$true] %s22
      %25 = dma.hbm_to_vmem [thread:$0]  %s0, 16, %s23, [#allocation3]
    $region5: #{tpu_custom_call.1} parent=1 // pred_fallthru
      _
    // Predicated region
    $region6: #{tpu_custom_call.1} parent=1 // pred_check
      _
    $region7: #{tpu_custom_call.1} parent=1 // pred_check_branch
      %27 = sbr.rel (0) target = $region9
    $region8: #{tpu_custom_call.1} parent=1 // pred_region
      %s29 = ssub.s32 2048, 2048
      %30 = vsyncadd [#allocation6], %s29
      %s31 = sshll.u32 [#allocation5], 4
      %s32 = int_to_ptr.vmem [resolvable:$true] %s31
      %37 = dma.hbm_to_vmem [thread:$0]  %s1, 2048, %s32, [#allocation6], 512, 512, 32
    $region9: #{tpu_custom_call.1} parent=1 // pred_fallthru
      _
    // Predicated region
    $region10: #{tpu_custom_call.1} parent=1 // pred_check
      _
    $region11: #{tpu_custom_call.1} parent=1 // pred_check_branch
      %39 = sbr.rel (0) target = $region13
    $region12: #{tpu_custom_call.1} parent=1 // pred_region
      %s41 = ssub.s32 128, 128
      %42 = vsyncadd [#allocation6], %s41
      %s44 = sshll.u32 [#allocation7], 4
      %s45 = int_to_ptr.vmem [resolvable:$true] %s44
      %47 = dma.hbm_to_vmem [thread:$0]  %s2, 128, %s45, [#allocation6]
    $region13: #{tpu_custom_call.1} parent=1 // pred_fallthru
      _
    // Predicated region
    $region14: #{tpu_custom_call.1} parent=1 // pred_check
      _
    $region15: #{tpu_custom_call.1} parent=1 // pred_check_branch
      %49 = sbr.rel (0) target = $region17
    $region16: #{tpu_custom_call.1} parent=1 // pred_region
      %s51 = ssub.s32 16384, 16384
      %52 = vsyncadd [#allocation9], %s51
      %s53 = sshll.u32 [#allocation8], 4
      %s54 = int_to_ptr.vmem [resolvable:$true] %s53
      %59 = dma.hbm_to_vmem [thread:$0]  %s3, 16384, %s54, [#allocation9], 128, 128, 8
    $region17: #{tpu_custom_call.1} parent=1 // pred_fallthru
      _
    // Predicated region
    $region18: #{tpu_custom_call.1} parent=1 // pred_check
      _
    $region19: #{tpu_custom_call.1} parent=1 // pred_check_branch
      %61 = sbr.rel (0) target = $region21
    $region20: #{tpu_custom_call.1} parent=1 // pred_region
      _
    $region21: #{tpu_custom_call.1} parent=1 // pred_fallthru
      _
    // Predicated region
    $region22: #{tpu_custom_call.1} parent=1 // pred_check
      _
    $region23: #{tpu_custom_call.1} parent=1 // pred_check_branch
      %63 = sbr.rel (0) target = $region25
    $region24: #{tpu_custom_call.1} parent=1 // pred_region
      %s65 = ssub.s32 2048, 2048
      %66 = vsyncadd [#allocation9], %s65
      %s67 = sshll.u32 [#allocation10], 4
      %s68 = int_to_ptr.vmem [resolvable:$true] %s67
      %73 = dma.hbm_to_vmem [thread:$0]  %s5, 2048, %s68, [#allocation9], 64, 64, 4
    $region25: #{tpu_custom_call.1} parent=1 // pred_fallthru
      _
    // Predicated region
    $region26: #{tpu_custom_call.1} parent=1 // pred_check
      _
    $region27: #{tpu_custom_call.1} parent=1 // pred_check_branch
      %75 = sbr.rel (0) target = $region29
    $region28: #{tpu_custom_call.1} parent=1 // pred_region
      _
    $region29: #{tpu_custom_call.1} parent=1 // pred_fallthru
      _
    // Predicated region
    $region30: #{tpu_custom_call.1} parent=1 // pred_check
      _
    $region31: #{tpu_custom_call.1} parent=1 // pred_check_branch
      %77 = sbr.rel (0) target = $region33
    $region32: #{tpu_custom_call.1} parent=1 // pred_region
      %78 = dma.done [#allocation3], 16
    $region33: #{tpu_custom_call.1} parent=1 // pred_fallthru
      _
    // Predicated region
    $region34: #{tpu_custom_call.1} parent=1 // pred_check
      _
    $region35: #{tpu_custom_call.1} parent=1 // pred_check_branch
      %80 = sbr.rel (0) target = $region37
    $region36: #{tpu_custom_call.1} parent=1 // pred_region
      %81 = dma.done [#allocation6], 2048
    $region37: #{tpu_custom_call.1} parent=1 // pred_fallthru
      _
    // Predicated region
    $region38: #{tpu_custom_call.1} parent=1 // pred_check
      _
    $region39: #{tpu_custom_call.1} parent=1 // pred_check_branch
      %83 = sbr.rel (0) target = $region41
    $region40: #{tpu_custom_call.1} parent=1 // pred_region
      %84 = dma.done [#allocation6], 128
    $region41: #{tpu_custom_call.1} parent=1 // pred_fallthru
      _
    // Predicated region
    $region42: #{tpu_custom_call.1} parent=1 // pred_check
      _
    $region43: #{tpu_custom_call.1} parent=1 // pred_check_branch
      %86 = sbr.rel (0) target = $region45
    $region44: #{tpu_custom_call.1} parent=1 // pred_region
      %87 = dma.done [#allocation9], 16384
    $region45: #{tpu_custom_call.1} parent=1 // pred_fallthru
      _
    // Predicated region
    $region46: #{tpu_custom_call.1} parent=1 // pred_check
      _
    $region47: #{tpu_custom_call.1} parent=1 // pred_check_branch
      %89 = sbr.rel (0) target = $region49
    $region48: #{tpu_custom_call.1} parent=1 // pred_region
      %90 = dma.done [#allocation9], 2048
    $region49: #{tpu_custom_call.1} parent=1 // pred_fallthru
      _
    %v92 = vld [vmem:[#allocation2] sm:$0x1]
    %v93 = vld [vmem:[#allocation5] sm:$0xff]
    %v94 = vld [vmem:[#allocation5 + $0x8] sm:$0xff]
    %v95 = vld [vmem:[#allocation5 + $0x10] sm:$0xff]
    %v96 = vld [vmem:[#allocation5 + $0x18] sm:$0xff]
    %v97 = vld [vmem:[#allocation5 + $0x20] sm:$0xff]
    %v98 = vld [vmem:[#allocation5 + $0x28] sm:$0xff]
    %v99 = vld [vmem:[#allocation5 + $0x30] sm:$0xff]
    %v100 = vld [vmem:[#allocation5 + $0x38] sm:$0xff]
    %v101 = vld [vmem:[#allocation5 + $0x40] sm:$0xff]
    %v102 = vld [vmem:[#allocation5 + $0x48] sm:$0xff]
    %v103 = vld [vmem:[#allocation5 + $0x50] sm:$0xff]
    %v104 = vld [vmem:[#allocation5 + $0x58] sm:$0xff]
    %v105 = vld [vmem:[#allocation5 + $0x60] sm:$0xff]
    %v106 = vld [vmem:[#allocation5 + $0x68] sm:$0xff]
    %v107 = vld [vmem:[#allocation5 + $0x70] sm:$0xff]
    %v108 = vld [vmem:[#allocation5 + $0x78] sm:$0xff]
    %v109 = vld [vmem:[#allocation7] sm:$0xff]
    %v111 = vlaneseq
    %v112 = vshrl.u32 %v111, 7
    %v113 = vsub.s32 0, %v112
    %v114 = vrot.slane %v109, %v113
    %v115 = vlaneseq
    %v116 = vshrl.u32 %v115, 7
    %v117 = vsub.s32 1, %v116
    %v118 = vrot.slane %v109, %v117
    %v119 = vlaneseq
    %v120 = vshrl.u32 %v119, 7
    %v121 = vsub.s32 2, %v120
    %v122 = vrot.slane %v109, %v121
    %v123 = vlaneseq
    %v124 = vshrl.u32 %v123, 7
    %v125 = vsub.s32 3, %v124
    %v126 = vrot.slane %v109, %v125
    %v127 = vlaneseq
    %v128 = vshrl.u32 %v127, 7
    %v129 = vsub.s32 4, %v128
    %v130 = vrot.slane %v109, %v129
    %v131 = vlaneseq
    %v132 = vshrl.u32 %v131, 7
    %v133 = vsub.s32 5, %v132
    %v134 = vrot.slane %v109, %v133
    %v135 = vlaneseq
    %v136 = vshrl.u32 %v135, 7
    %v137 = vsub.s32 6, %v136
    %v138 = vrot.slane %v109, %v137
    %v139 = vlaneseq
    %v140 = vshrl.u32 %v139, 7
    %v141 = vsub.s32 7, %v140
    %v142 = vrot.slane %v109, %v141
    %v167 = vunpack.c.l.b16 %v93
    %v168 = vunpack.c.h.b16 %v93
    %v169 = vunpack.c.l.b16 %v94
    %v170 = vunpack.c.h.b16 %v94
    %v171 = vunpack.c.l.b16 %v95
    %v172 = vunpack.c.h.b16 %v95
    %v173 = vunpack.c.l.b16 %v96
    %v174 = vunpack.c.h.b16 %v96
    %v175 = vunpack.c.l.b16 %v97
    %v176 = vunpack.c.h.b16 %v97
    %v177 = vunpack.c.l.b16 %v98
    %v178 = vunpack.c.h.b16 %v98
    %v179 = vunpack.c.l.b16 %v99
    %v180 = vunpack.c.h.b16 %v99
    %v181 = vunpack.c.l.b16 %v100
    %v182 = vunpack.c.h.b16 %v100
    %v183 = vunpack.c.l.b16 %v101
    %v184 = vunpack.c.h.b16 %v101
    %v185 = vunpack.c.l.b16 %v102
    %v186 = vunpack.c.h.b16 %v102
    %v187 = vunpack.c.l.b16 %v103
    %v188 = vunpack.c.h.b16 %v103
    %v189 = vunpack.c.l.b16 %v104
    %v190 = vunpack.c.h.b16 %v104
    %v191 = vunpack.c.l.b16 %v105
    %v192 = vunpack.c.h.b16 %v105
    %v193 = vunpack.c.l.b16 %v106
    %v194 = vunpack.c.h.b16 %v106
    %v195 = vunpack.c.l.b16 %v107
    %v196 = vunpack.c.h.b16 %v107
    %v197 = vunpack.c.l.b16 %v108
    %v198 = vunpack.c.h.b16 %v108
    %v199 = vpack.c.b16 %v175, %v167
    %v200 = vpack.c.b16 %v176, %v168
    %v201 = vpack.c.b16 %v177, %v169
    %v202 = vpack.c.b16 %v178, %v170
    %v203 = vpack.c.b16 %v179, %v171
    %v204 = vpack.c.b16 %v180, %v172
    %v205 = vpack.c.b16 %v181, %v173
    %v206 = vpack.c.b16 %v182, %v174
    %v207 = vpack.c.b16 %v191, %v183
    %v208 = vpack.c.b16 %v192, %v184
    %v209 = vpack.c.b16 %v193, %v185
    %v210 = vpack.c.b16 %v194, %v186
    %v211 = vpack.c.b16 %v195, %v187
    %v212 = vpack.c.b16 %v196, %v188
    %v213 = vpack.c.b16 %v197, %v189
    %v214 = vpack.c.b16 %v198, %v190
    %vm231 = vcmask 261120
    %v233 = vsel %vm231, %v92, 0
    %235 = vmatprep.subr.bf16.mxu0 %v200
    %236 = vmatpush1.bf16.msra.mxu0 %v199
    %237 = vmatprep.subr.bf16.mxu0 %v208
    %238 = vmatpush1.bf16.msra.mxu0 %v207
    %239 = vmatprep.subr.bf16.mxu0 0
    %240 = vmatpush1.bf16.msra.mxu0 0
    %241 = vmatprep.subr.bf16.mxu0 0
    %242 = vmatpush1.bf16.msra.mxu0 0
    %243 = vmatprep.subr.bf16.mxu0 0
    %244 = vmatpush1.bf16.msra.mxu0 0
    %245 = vmatprep.subr.bf16.mxu0 0
    %246 = vmatpush1.bf16.msra.mxu0 0
    %247 = vmatprep.subr.bf16.mxu0 0
    %248 = vmatpush1.bf16.msra.mxu0 0
    %249 = vmatprep.subr.bf16.mxu0 0
    %250 = vmatpush1.bf16.msra.mxu0 0
    %251 = vmatprep.subr.bf16.mxu0 0
    %252 = vmatpush1.bf16.msra.mxu0 0
    %253 = vmatprep.subr.bf16.mxu0 0
    %254 = vmatpush1.bf16.msra.mxu0 0
    %255 = vmatprep.subr.bf16.mxu0 0
    %256 = vmatpush1.bf16.msra.mxu0 0
    %257 = vmatprep.subr.bf16.mxu0 0
    %258 = vmatpush1.bf16.msra.mxu0 0
    %259 = vmatprep.subr.bf16.mxu0 0
    %260 = vmatpush1.bf16.msra.mxu0 0
    %261 = vmatprep.subr.bf16.mxu0 0
    %262 = vmatpush1.bf16.msra.mxu0 0
    %263 = vmatprep.subr.bf16.mxu0 0
    %264 = vmatpush1.bf16.msra.mxu0 0
    %265 = vmatprep.subr.bf16.mxu0 0
    %266 = vmatpush1.bf16.msra.mxu0 0
    %267 = vmatprep.mubr.bf16.mxu0 0
    %268 = vmatmul.mubr.bf16.gmra.mrb[0].mxu0 %v233
    %v269 = vpop.f32.mrb[0].mxu0
    %v270 = vadd.f32 %v114, %v269
    %v271 = vpop.f32.mrb[0].mxu0
    %v272 = vadd.f32 %v118, %v271
    %v273 = vpop.f32.mrb[0].mxu0
    %v274 = vpop.f32.mrb[0].mxu0
    %275 = vdwg.mxu0
    %276 = vmatprep.subr.bf16.mxu0 %v202
    %277 = vmatpush1.bf16.msra.mxu0 %v201
    %278 = vmatprep.subr.bf16.mxu0 %v210
    %279 = vmatpush1.bf16.msra.mxu0 %v209
    %280 = vmatprep.subr.bf16.mxu0 0
    %281 = vmatpush1.bf16.msra.mxu0 0
    %282 = vmatprep.subr.bf16.mxu0 0
    %283 = vmatpush1.bf16.msra.mxu0 0
    %284 = vmatprep.subr.bf16.mxu0 0
    %285 = vmatpush1.bf16.msra.mxu0 0
    %286 = vmatprep.subr.bf16.mxu0 0
    %287 = vmatpush1.bf16.msra.mxu0 0
    %288 = vmatprep.subr.bf16.mxu0 0
    %289 = vmatpush1.bf16.msra.mxu0 0
    %290 = vmatprep.subr.bf16.mxu0 0
    %291 = vmatpush1.bf16.msra.mxu0 0
    %292 = vmatprep.subr.bf16.mxu0 0
    %293 = vmatpush1.bf16.msra.mxu0 0
    %294 = vmatprep.subr.bf16.mxu0 0
    %295 = vmatpush1.bf16.msra.mxu0 0
    %296 = vmatprep.subr.bf16.mxu0 0
    %297 = vmatpush1.bf16.msra.mxu0 0
    %298 = vmatprep.subr.bf16.mxu0 0
    %299 = vmatpush1.bf16.msra.mxu0 0
    %300 = vmatprep.subr.bf16.mxu0 0
    %301 = vmatpush1.bf16.msra.mxu0 0
    %302 = vmatprep.subr.bf16.mxu0 0
    %303 = vmatpush1.bf16.msra.mxu0 0
    %304 = vmatprep.subr.bf16.mxu0 0
    %305 = vmatpush1.bf16.msra.mxu0 0
    %306 = vmatprep.subr.bf16.mxu0 0
    %307 = vmatpush1.bf16.msra.mxu0 0
    %308 = vmatprep.mubr.bf16.mxu0 0
    %309 = vmatmul.mubr.bf16.gmra.mrb[0].mxu0 %v233
    %v310 = vpop.f32.mrb[0].mxu0
    %v311 = vadd.f32 %v122, %v310
    %v312 = vpop.f32.mrb[0].mxu0
    %v313 = vadd.f32 %v126, %v312
    %v314 = vpop.f32.mrb[0].mxu0
    %v315 = vpop.f32.mrb[0].mxu0
    %316 = vdwg.mxu0
    %317 = vmatprep.subr.bf16.mxu0 %v204
    %318 = vmatpush1.bf16.msra.mxu0 %v203
    %319 = vmatprep.subr.bf16.mxu0 %v212
    %320 = vmatpush1.bf16.msra.mxu0 %v211
    %321 = vmatprep.subr.bf16.mxu0 0
    %322 = vmatpush1.bf16.msra.mxu0 0
    %323 = vmatprep.subr.bf16.mxu0 0
    %324 = vmatpush1.bf16.msra.mxu0 0
    %325 = vmatprep.subr.bf16.mxu0 0
    %326 = vmatpush1.bf16.msra.mxu0 0
    %327 = vmatprep.subr.bf16.mxu0 0
    %328 = vmatpush1.bf16.msra.mxu0 0
    %329 = vmatprep.subr.bf16.mxu0 0
    %330 = vmatpush1.bf16.msra.mxu0 0
    %331 = vmatprep.subr.bf16.mxu0 0
    %332 = vmatpush1.bf16.msra.mxu0 0
    %333 = vmatprep.subr.bf16.mxu0 0
    %334 = vmatpush1.bf16.msra.mxu0 0
    %335 = vmatprep.subr.bf16.mxu0 0
    %336 = vmatpush1.bf16.msra.mxu0 0
    %337 = vmatprep.subr.bf16.mxu0 0
    %338 = vmatpush1.bf16.msra.mxu0 0
    %339 = vmatprep.subr.bf16.mxu0 0
    %340 = vmatpush1.bf16.msra.mxu0 0
    %341 = vmatprep.subr.bf16.mxu0 0
    %342 = vmatpush1.bf16.msra.mxu0 0
    %343 = vmatprep.subr.bf16.mxu0 0
    %344 = vmatpush1.bf16.msra.mxu0 0
    %345 = vmatprep.subr.bf16.mxu0 0
    %346 = vmatpush1.bf16.msra.mxu0 0
    %347 = vmatprep.subr.bf16.mxu0 0
    %348 = vmatpush1.bf16.msra.mxu0 0
    %349 = vmatprep.mubr.bf16.mxu0 0
    %350 = vmatmul.mubr.bf16.gmra.mrb[0].mxu0 %v233
    %v351 = vpop.f32.mrb[0].mxu0
    %v352 = vadd.f32 %v130, %v351
    %v353 = vpop.f32.mrb[0].mxu0
    %v354 = vadd.f32 %v134, %v353
    %v355 = vpop.f32.mrb[0].mxu0
    %v356 = vpop.f32.mrb[0].mxu0
    %357 = vdwg.mxu0
    %358 = vmatprep.subr.bf16.mxu0 %v206
    %359 = vmatpush1.bf16.msra.mxu0 %v205
    %360 = vmatprep.subr.bf16.mxu0 %v214
    %361 = vmatpush1.bf16.msra.mxu0 %v213
    %362 = vmatprep.subr.bf16.mxu0 0
    %363 = vmatpush1.bf16.msra.mxu0 0
    %364 = vmatprep.subr.bf16.mxu0 0
    %365 = vmatpush1.bf16.msra.mxu0 0
    %366 = vmatprep.subr.bf16.mxu0 0
    %367 = vmatpush1.bf16.msra.mxu0 0
    %368 = vmatprep.subr.bf16.mxu0 0
    %369 = vmatpush1.bf16.msra.mxu0 0
    %370 = vmatprep.subr.bf16.mxu0 0
    %371 = vmatpush1.bf16.msra.mxu0 0
    %372 = vmatprep.subr.bf16.mxu0 0
    %373 = vmatpush1.bf16.msra.mxu0 0
    %374 = vmatprep.subr.bf16.mxu0 0
    %375 = vmatpush1.bf16.msra.mxu0 0
    %376 = vmatprep.subr.bf16.mxu0 0
    %377 = vmatpush1.bf16.msra.mxu0 0
    %378 = vmatprep.subr.bf16.mxu0 0
    %379 = vmatpush1.bf16.msra.mxu0 0
    %380 = vmatprep.subr.bf16.mxu0 0
    %381 = vmatpush1.bf16.msra.mxu0 0
    %382 = vmatprep.subr.bf16.mxu0 0
    %383 = vmatpush1.bf16.msra.mxu0 0
    %384 = vmatprep.subr.bf16.mxu0 0
    %385 = vmatpush1.bf16.msra.mxu0 0
    %386 = vmatprep.subr.bf16.mxu0 0
    %387 = vmatpush1.bf16.msra.mxu0 0
    %388 = vmatprep.subr.bf16.mxu0 0
    %389 = vmatpush1.bf16.msra.mxu0 0
    %390 = vmatprep.mubr.bf16.mxu0 0
    %391 = vmatmul.mubr.bf16.gmra.mrb[0].mxu0 %v233
    %v392 = vpop.f32.mrb[0].mxu0
    %v393 = vadd.f32 %v138, %v392
    %v394 = vpop.f32.mrb[0].mxu0
    %v395 = vadd.f32 %v142, %v394
    %v396 = vpop.f32.mrb[0].mxu0
    %v397 = vpop.f32.mrb[0].mxu0
    %398 = vdwg.mxu0
    %v399 = vmax.f32 %v270, 0.0
    %v400 = vmax.f32 %v272, 0.0
    %v401 = vmax.f32 %v311, 0.0
    %v402 = vmax.f32 %v313, 0.0
    %v403 = vmax.f32 %v352, 0.0
    %v404 = vmax.f32 %v354, 0.0
    %v405 = vmax.f32 %v393, 0.0
    %v406 = vmax.f32 %v395, 0.0
    %v407 = vpack.c.bf16 %v399, %v399
    %v408 = vpack.c.bf16 %v400, %v400
    %v409 = vpack.c.bf16 %v401, %v401
    %v410 = vpack.c.bf16 %v402, %v402
    %v411 = vpack.c.bf16 %v403, %v403
    %v412 = vpack.c.bf16 %v404, %v404
    %v413 = vpack.c.bf16 %v405, %v405
    %v414 = vpack.c.bf16 %v406, %v406
    %v415 = vld [vmem:[#allocation8] sm:$0xff]
    %v416 = vld [vmem:[#allocation8 + $0x8] sm:$0xff]
    %v417 = vld [vmem:[#allocation8 + $0x10] sm:$0xff]
    %v418 = vld [vmem:[#allocation8 + $0x18] sm:$0xff]
    %v419 = vld [vmem:[#allocation8 + $0x20] sm:$0xff]
    %v420 = vld [vmem:[#allocation8 + $0x28] sm:$0xff]
    %v421 = vld [vmem:[#allocation8 + $0x30] sm:$0xff]
    %v422 = vld [vmem:[#allocation8 + $0x38] sm:$0xff]
    %v423 = vld [vmem:[#allocation8 + $0x40] sm:$0xff]
    %v424 = vld [vmem:[#allocation8 + $0x48] sm:$0xff]
    %v425 = vld [vmem:[#allocation8 + $0x50] sm:$0xff]
    %v426 = vld [vmem:[#allocation8 + $0x58] sm:$0xff]
    %v427 = vld [vmem:[#allocation8 + $0x60] sm:$0xff]
    %v428 = vld [vmem:[#allocation8 + $0x68] sm:$0xff]
    %v429 = vld [vmem:[#allocation8 + $0x70] sm:$0xff]
    %v430 = vld [vmem:[#allocation8 + $0x78] sm:$0xff]
    %v431 = vld [vmem:[#allocation8 + $0x80] sm:$0xff]
    %v432 = vld [vmem:[#allocation8 + $0x88] sm:$0xff]
    %v433 = vld [vmem:[#allocation8 + $0x90] sm:$0xff]
    %v434 = vld [vmem:[#allocation8 + $0x98] sm:$0xff]
    %v435 = vld [vmem:[#allocation8 + $0xa0] sm:$0xff]
    %v436 = vld [vmem:[#allocation8 + $0xa8] sm:$0xff]
    %v437 = vld [vmem:[#allocation8 + $0xb0] sm:$0xff]
    %v438 = vld [vmem:[#allocation8 + $0xb8] sm:$0xff]
    %v439 = vld [vmem:[#allocation8 + $0xc0] sm:$0xff]
    %v440 = vld [vmem:[#allocation8 + $0xc8] sm:$0xff]
    %v441 = vld [vmem:[#allocation8 + $0xd0] sm:$0xff]
    %v442 = vld [vmem:[#allocation8 + $0xd8] sm:$0xff]
    %v443 = vld [vmem:[#allocation8 + $0xe0] sm:$0xff]
    %v444 = vld [vmem:[#allocation8 + $0xe8] sm:$0xff]
    %v445 = vld [vmem:[#allocation8 + $0xf0] sm:$0xff]
    %v446 = vld [vmem:[#allocation8 + $0xf8] sm:$0xff]
    %v447 = vld [vmem:[#allocation8 + $0x100] sm:$0xff]
    %v448 = vld [vmem:[#allocation8 + $0x108] sm:$0xff]
    %v449 = vld [vmem:[#allocation8 + $0x110] sm:$0xff]
    %v450 = vld [vmem:[#allocation8 + $0x118] sm:$0xff]
    %v451 = vld [vmem:[#allocation8 + $0x120] sm:$0xff]
    %v452 = vld [vmem:[#allocation8 + $0x128] sm:$0xff]
    %v453 = vld [vmem:[#allocation8 + $0x130] sm:$0xff]
    %v454 = vld [vmem:[#allocation8 + $0x138] sm:$0xff]
    %v455 = vld [vmem:[#allocation8 + $0x140] sm:$0xff]
    %v456 = vld [vmem:[#allocation8 + $0x148] sm:$0xff]
    %v457 = vld [vmem:[#allocation8 + $0x150] sm:$0xff]
    %v458 = vld [vmem:[#allocation8 + $0x158] sm:$0xff]
    %v459 = vld [vmem:[#allocation8 + $0x160] sm:$0xff]
    %v460 = vld [vmem:[#allocation8 + $0x168] sm:$0xff]
    %v461 = vld [vmem:[#allocation8 + $0x170] sm:$0xff]
    %v462 = vld [vmem:[#allocation8 + $0x178] sm:$0xff]
    %v463 = vld [vmem:[#allocation8 + $0x180] sm:$0xff]
    %v464 = vld [vmem:[#allocation8 + $0x188] sm:$0xff]
    %v465 = vld [vmem:[#allocation8 + $0x190] sm:$0xff]
    %v466 = vld [vmem:[#allocation8 + $0x198] sm:$0xff]
    %v467 = vld [vmem:[#allocation8 + $0x1a0] sm:$0xff]
    %v468 = vld [vmem:[#allocation8 + $0x1a8] sm:$0xff]
    %v469 = vld [vmem:[#allocation8 + $0x1b0] sm:$0xff]
    %v470 = vld [vmem:[#allocation8 + $0x1b8] sm:$0xff]
    %v471 = vld [vmem:[#allocation8 + $0x1c0] sm:$0xff]
    %v472 = vld [vmem:[#allocation8 + $0x1c8] sm:$0xff]
    %v473 = vld [vmem:[#allocation8 + $0x1d0] sm:$0xff]
    %v474 = vld [vmem:[#allocation8 + $0x1d8] sm:$0xff]
    %v475 = vld [vmem:[#allocation8 + $0x1e0] sm:$0xff]
    %v476 = vld [vmem:[#allocation8 + $0x1e8] sm:$0xff]
    %v477 = vld [vmem:[#allocation8 + $0x1f0] sm:$0xff]
    %v478 = vld [vmem:[#allocation8 + $0x1f8] sm:$0xff]
    %v479 = vld [vmem:[#allocation8 + $0x200] sm:$0xff]
    %v480 = vld [vmem:[#allocation8 + $0x208] sm:$0xff]
    %v481 = vld [vmem:[#allocation8 + $0x210] sm:$0xff]
    %v482 = vld [vmem:[#allocation8 + $0x218] sm:$0xff]
    %v483 = vld [vmem:[#allocation8 + $0x220] sm:$0xff]
    %v484 = vld [vmem:[#allocation8 + $0x228] sm:$0xff]
    %v485 = vld [vmem:[#allocation8 + $0x230] sm:$0xff]
    %v486 = vld [vmem:[#allocation8 + $0x238] sm:$0xff]
    %v487 = vld [vmem:[#allocation8 + $0x240] sm:$0xff]
    %v488 = vld [vmem:[#allocation8 + $0x248] sm:$0xff]
    %v489 = vld [vmem:[#allocation8 + $0x250] sm:$0xff]
    %v490 = vld [vmem:[#allocation8 + $0x258] sm:$0xff]
    %v491 = vld [vmem:[#allocation8 + $0x260] sm:$0xff]
    %v492 = vld [vmem:[#allocation8 + $0x268] sm:$0xff]
    %v493 = vld [vmem:[#allocation8 + $0x270] sm:$0xff]
    %v494 = vld [vmem:[#allocation8 + $0x278] sm:$0xff]
    %v495 = vld [vmem:[#allocation8 + $0x280] sm:$0xff]
    %v496 = vld [vmem:[#allocation8 + $0x288] sm:$0xff]
    %v497 = vld [vmem:[#allocation8 + $0x290] sm:$0xff]
    %v498 = vld [vmem:[#allocation8 + $0x298] sm:$0xff]
    %v499 = vld [vmem:[#allocation8 + $0x2a0] sm:$0xff]
    %v500 = vld [vmem:[#allocation8 + $0x2a8] sm:$0xff]
    %v501 = vld [vmem:[#allocation8 + $0x2b0] sm:$0xff]
    %v502 = vld [vmem:[#allocation8 + $0x2b8] sm:$0xff]
    %v503 = vld [vmem:[#allocation8 + $0x2c0] sm:$0xff]
    %v504 = vld [vmem:[#allocation8 + $0x2c8] sm:$0xff]
    %v505 = vld [vmem:[#allocation8 + $0x2d0] sm:$0xff]
    %v506 = vld [vmem:[#allocation8 + $0x2d8] sm:$0xff]
    %v507 = vld [vmem:[#allocation8 + $0x2e0] sm:$0xff]
    %v508 = vld [vmem:[#allocation8 + $0x2e8] sm:$0xff]
    %v509 = vld [vmem:[#allocation8 + $0x2f0] sm:$0xff]
    %v510 = vld [vmem:[#allocation8 + $0x2f8] sm:$0xff]
    %v511 = vld [vmem:[#allocation8 + $0x300] sm:$0xff]
    %v512 = vld [vmem:[#allocation8 + $0x308] sm:$0xff]
    %v513 = vld [vmem:[#allocation8 + $0x310] sm:$0xff]
    %v514 = vld [vmem:[#allocation8 + $0x318] sm:$0xff]
    %v515 = vld [vmem:[#allocation8 + $0x320] sm:$0xff]
    %v516 = vld [vmem:[#allocation8 + $0x328] sm:$0xff]
    %v517 = vld [vmem:[#allocation8 + $0x330] sm:$0xff]
    %v518 = vld [vmem:[#allocation8 + $0x338] sm:$0xff]
    %v519 = vld [vmem:[#allocation8 + $0x340] sm:$0xff]
    %v520 = vld [vmem:[#allocation8 + $0x348] sm:$0xff]
    %v521 = vld [vmem:[#allocation8 + $0x350] sm:$0xff]
    %v522 = vld [vmem:[#allocation8 + $0x358] sm:$0xff]
    %v523 = vld [vmem:[#allocation8 + $0x360] sm:$0xff]
    %v524 = vld [vmem:[#allocation8 + $0x368] sm:$0xff]
    %v525 = vld [vmem:[#allocation8 + $0x370] sm:$0xff]
    %v526 = vld [vmem:[#allocation8 + $0x378] sm:$0xff]
    %v527 = vld [vmem:[#allocation8 + $0x380] sm:$0xff]
    %v528 = vld [vmem:[#allocation8 + $0x388] sm:$0xff]
    %v529 = vld [vmem:[#allocation8 + $0x390] sm:$0xff]
    %v530 = vld [vmem:[#allocation8 + $0x398] sm:$0xff]
    %v531 = vld [vmem:[#allocation8 + $0x3a0] sm:$0xff]
    %v532 = vld [vmem:[#allocation8 + $0x3a8] sm:$0xff]
    %v533 = vld [vmem:[#allocation8 + $0x3b0] sm:$0xff]
    %v534 = vld [vmem:[#allocation8 + $0x3b8] sm:$0xff]
    %v535 = vld [vmem:[#allocation8 + $0x3c0] sm:$0xff]
    %v536 = vld [vmem:[#allocation8 + $0x3c8] sm:$0xff]
    %v537 = vld [vmem:[#allocation8 + $0x3d0] sm:$0xff]
    %v538 = vld [vmem:[#allocation8 + $0x3d8] sm:$0xff]
    %v539 = vld [vmem:[#allocation8 + $0x3e0] sm:$0xff]
    %v540 = vld [vmem:[#allocation8 + $0x3e8] sm:$0xff]
    %v541 = vld [vmem:[#allocation8 + $0x3f0] sm:$0xff]
    %v542 = vld [vmem:[#allocation8 + $0x3f8] sm:$0xff]
    %v543 = vld [vmem:[%s4] sm:$0x3]
    %v545 = vlaneseq
    %v546 = vshrl.u32 %v545, 7
    %v547 = vsub.s32 0, %v546
    %v548 = vrot.slane %v543, %v547
    %v549 = vlaneseq
    %v550 = vshrl.u32 %v549, 7
    %v551 = vsub.s32 1, %v550
    %v552 = vrot.slane %v543, %v551
    %v683 = vunpack.c.l.b16 %v415
    %v684 = vunpack.c.h.b16 %v415
    %v685 = vunpack.c.l.b16 %v416
    %v686 = vunpack.c.h.b16 %v416
    %v687 = vunpack.c.l.b16 %v417
    %v688 = vunpack.c.h.b16 %v417
    %v689 = vunpack.c.l.b16 %v418
    %v690 = vunpack.c.h.b16 %v418
    %v691 = vunpack.c.l.b16 %v419
    %v692 = vunpack.c.h.b16 %v419
    %v693 = vunpack.c.l.b16 %v420
    %v694 = vunpack.c.h.b16 %v420
    %v695 = vunpack.c.l.b16 %v421
    %v696 = vunpack.c.h.b16 %v421
    %v697 = vunpack.c.l.b16 %v422
    %v698 = vunpack.c.h.b16 %v422
    %v699 = vunpack.c.l.b16 %v423
    %v700 = vunpack.c.h.b16 %v423
    %v701 = vunpack.c.l.b16 %v424
    %v702 = vunpack.c.h.b16 %v424
    %v703 = vunpack.c.l.b16 %v425
    %v704 = vunpack.c.h.b16 %v425
    %v705 = vunpack.c.l.b16 %v426
    %v706 = vunpack.c.h.b16 %v426
    %v707 = vunpack.c.l.b16 %v427
    %v708 = vunpack.c.h.b16 %v427
    %v709 = vunpack.c.l.b16 %v428
    %v710 = vunpack.c.h.b16 %v428
    %v711 = vunpack.c.l.b16 %v429
    %v712 = vunpack.c.h.b16 %v429
    %v713 = vunpack.c.l.b16 %v430
    %v714 = vunpack.c.h.b16 %v430
    %v715 = vunpack.c.l.b16 %v431
    %v716 = vunpack.c.h.b16 %v431
    %v717 = vunpack.c.l.b16 %v432
    %v718 = vunpack.c.h.b16 %v432
    %v719 = vunpack.c.l.b16 %v433
    %v720 = vunpack.c.h.b16 %v433
    %v721 = vunpack.c.l.b16 %v434
    %v722 = vunpack.c.h.b16 %v434
    %v723 = vunpack.c.l.b16 %v435
    %v724 = vunpack.c.h.b16 %v435
    %v725 = vunpack.c.l.b16 %v436
    %v726 = vunpack.c.h.b16 %v436
    %v727 = vunpack.c.l.b16 %v437
    %v728 = vunpack.c.h.b16 %v437
    %v729 = vunpack.c.l.b16 %v438
    %v730 = vunpack.c.h.b16 %v438
    %v731 = vunpack.c.l.b16 %v439
    %v732 = vunpack.c.h.b16 %v439
    %v733 = vunpack.c.l.b16 %v440
    %v734 = vunpack.c.h.b16 %v440
    %v735 = vunpack.c.l.b16 %v441
    %v736 = vunpack.c.h.b16 %v441
    %v737 = vunpack.c.l.b16 %v442
    %v738 = vunpack.c.h.b16 %v442
    %v739 = vunpack.c.l.b16 %v443
    %v740 = vunpack.c.h.b16 %v443
    %v741 = vunpack.c.l.b16 %v444
    %v742 = vunpack.c.h.b16 %v444
    %v743 = vunpack.c.l.b16 %v445
    %v744 = vunpack.c.h.b16 %v445
    %v745 = vunpack.c.l.b16 %v446
    %v746 = vunpack.c.h.b16 %v446
    %v747 = vunpack.c.l.b16 %v447
    %v748 = vunpack.c.h.b16 %v447
    %v749 = vunpack.c.l.b16 %v448
    %v750 = vunpack.c.h.b16 %v448
    %v751 = vunpack.c.l.b16 %v449
    %v752 = vunpack.c.h.b16 %v449
    %v753 = vunpack.c.l.b16 %v450
    %v754 = vunpack.c.h.b16 %v450
    %v755 = vunpack.c.l.b16 %v451
    %v756 = vunpack.c.h.b16 %v451
    %v757 = vunpack.c.l.b16 %v452
    %v758 = vunpack.c.h.b16 %v452
    %v759 = vunpack.c.l.b16 %v453
    %v760 = vunpack.c.h.b16 %v453
    %v761 = vunpack.c.l.b16 %v454
    %v762 = vunpack.c.h.b16 %v454
    %v763 = vunpack.c.l.b16 %v455
    %v764 = vunpack.c.h.b16 %v455
    %v765 = vunpack.c.l.b16 %v456
    %v766 = vunpack.c.h.b16 %v456
    %v767 = vunpack.c.l.b16 %v457
    %v768 = vunpack.c.h.b16 %v457
    %v769 = vunpack.c.l.b16 %v458
    %v770 = vunpack.c.h.b16 %v458
    %v771 = vunpack.c.l.b16 %v459
    %v772 = vunpack.c.h.b16 %v459
    %v773 = vunpack.c.l.b16 %v460
    %v774 = vunpack.c.h.b16 %v460
    %v775 = vunpack.c.l.b16 %v461
    %v776 = vunpack.c.h.b16 %v461
    %v777 = vunpack.c.l.b16 %v462
    %v778 = vunpack.c.h.b16 %v462
    %v779 = vunpack.c.l.b16 %v463
    %v780 = vunpack.c.h.b16 %v463
    %v781 = vunpack.c.l.b16 %v464
    %v782 = vunpack.c.h.b16 %v464
    %v783 = vunpack.c.l.b16 %v465
    %v784 = vunpack.c.h.b16 %v465
    %v785 = vunpack.c.l.b16 %v466
    %v786 = vunpack.c.h.b16 %v466
    %v787 = vunpack.c.l.b16 %v467
    %v788 = vunpack.c.h.b16 %v467
    %v789 = vunpack.c.l.b16 %v468
    %v790 = vunpack.c.h.b16 %v468
    %v791 = vunpack.c.l.b16 %v469
    %v792 = vunpack.c.h.b16 %v469
    %v793 = vunpack.c.l.b16 %v470
    %v794 = vunpack.c.h.b16 %v470
    %v795 = vunpack.c.l.b16 %v471
    %v796 = vunpack.c.h.b16 %v471
    %v797 = vunpack.c.l.b16 %v472
    %v798 = vunpack.c.h.b16 %v472
    %v799 = vunpack.c.l.b16 %v473
    %v800 = vunpack.c.h.b16 %v473
    %v801 = vunpack.c.l.b16 %v474
    %v802 = vunpack.c.h.b16 %v474
    %v803 = vunpack.c.l.b16 %v475
    %v804 = vunpack.c.h.b16 %v475
    %v805 = vunpack.c.l.b16 %v476
    %v806 = vunpack.c.h.b16 %v476
    %v807 = vunpack.c.l.b16 %v477
    %v808 = vunpack.c.h.b16 %v477
    %v809 = vunpack.c.l.b16 %v478
    %v810 = vunpack.c.h.b16 %v478
    %v811 = vunpack.c.l.b16 %v479
    %v812 = vunpack.c.h.b16 %v479
    %v813 = vunpack.c.l.b16 %v480
    %v814 = vunpack.c.h.b16 %v480
    %v815 = vunpack.c.l.b16 %v481
    %v816 = vunpack.c.h.b16 %v481
    %v817 = vunpack.c.l.b16 %v482
    %v818 = vunpack.c.h.b16 %v482
    %v819 = vunpack.c.l.b16 %v483
    %v820 = vunpack.c.h.b16 %v483
    %v821 = vunpack.c.l.b16 %v484
    %v822 = vunpack.c.h.b16 %v484
    %v823 = vunpack.c.l.b16 %v485
    %v824 = vunpack.c.h.b16 %v485
    %v825 = vunpack.c.l.b16 %v486
    %v826 = vunpack.c.h.b16 %v486
    %v827 = vunpack.c.l.b16 %v487
    %v828 = vunpack.c.h.b16 %v487
    %v829 = vunpack.c.l.b16 %v488
    %v830 = vunpack.c.h.b16 %v488
    %v831 = vunpack.c.l.b16 %v489
    %v832 = vunpack.c.h.b16 %v489
    %v833 = vunpack.c.l.b16 %v490
    %v834 = vunpack.c.h.b16 %v490
    %v835 = vunpack.c.l.b16 %v491
    %v836 = vunpack.c.h.b16 %v491
    %v837 = vunpack.c.l.b16 %v492
    %v838 = vunpack.c.h.b16 %v492
    %v839 = vunpack.c.l.b16 %v493
    %v840 = vunpack.c.h.b16 %v493
    %v841 = vunpack.c.l.b16 %v494
    %v842 = vunpack.c.h.b16 %v494
    %v843 = vunpack.c.l.b16 %v495
    %v844 = vunpack.c.h.b16 %v495
    %v845 = vunpack.c.l.b16 %v496
    %v846 = vunpack.c.h.b16 %v496
    %v847 = vunpack.c.l.b16 %v497
    %v848 = vunpack.c.h.b16 %v497
    %v849 = vunpack.c.l.b16 %v498
    %v850 = vunpack.c.h.b16 %v498
    %v851 = vunpack.c.l.b16 %v499
    %v852 = vunpack.c.h.b16 %v499
    %v853 = vunpack.c.l.b16 %v500
    %v854 = vunpack.c.h.b16 %v500
    %v855 = vunpack.c.l.b16 %v501
    %v856 = vunpack.c.h.b16 %v501
    %v857 = vunpack.c.l.b16 %v502
    %v858 = vunpack.c.h.b16 %v502
    %v859 = vunpack.c.l.b16 %v503
    %v860 = vunpack.c.h.b16 %v503
    %v861 = vunpack.c.l.b16 %v504
    %v862 = vunpack.c.h.b16 %v504
    %v863 = vunpack.c.l.b16 %v505
    %v864 = vunpack.c.h.b16 %v505
    %v865 = vunpack.c.l.b16 %v506
    %v866 = vunpack.c.h.b16 %v506
    %v867 = vunpack.c.l.b16 %v507
    %v868 = vunpack.c.h.b16 %v507
    %v869 = vunpack.c.l.b16 %v508
    %v870 = vunpack.c.h.b16 %v508
    %v871 = vunpack.c.l.b16 %v509
    %v872 = vunpack.c.h.b16 %v509
    %v873 = vunpack.c.l.b16 %v510
    %v874 = vunpack.c.h.b16 %v510
    %v875 = vunpack.c.l.b16 %v511
    %v876 = vunpack.c.h.b16 %v511
    %v877 = vunpack.c.l.b16 %v512
    %v878 = vunpack.c.h.b16 %v512
    %v879 = vunpack.c.l.b16 %v513
    %v880 = vunpack.c.h.b16 %v513
    %v881 = vunpack.c.l.b16 %v514
    %v882 = vunpack.c.h.b16 %v514
    %v883 = vunpack.c.l.b16 %v515
    %v884 = vunpack.c.h.b16 %v515
    %v885 = vunpack.c.l.b16 %v516
    %v886 = vunpack.c.h.b16 %v516
    %v887 = vunpack.c.l.b16 %v517
    %v888 = vunpack.c.h.b16 %v517
    %v889 = vunpack.c.l.b16 %v518
    %v890 = vunpack.c.h.b16 %v518
    %v891 = vunpack.c.l.b16 %v519
    %v892 = vunpack.c.h.b16 %v519
    %v893 = vunpack.c.l.b16 %v520
    %v894 = vunpack.c.h.b16 %v520
    %v895 = vunpack.c.l.b16 %v521
    %v896 = vunpack.c.h.b16 %v521
    %v897 = vunpack.c.l.b16 %v522
    %v898 = vunpack.c.h.b16 %v522
    %v899 = vunpack.c.l.b16 %v523
    %v900 = vunpack.c.h.b16 %v523
    %v901 = vunpack.c.l.b16 %v524
    %v902 = vunpack.c.h.b16 %v524
    %v903 = vunpack.c.l.b16 %v525
    %v904 = vunpack.c.h.b16 %v525
    %v905 = vunpack.c.l.b16 %v526
    %v906 = vunpack.c.h.b16 %v526
    %v907 = vunpack.c.l.b16 %v527
    %v908 = vunpack.c.h.b16 %v527
    %v909 = vunpack.c.l.b16 %v528
    %v910 = vunpack.c.h.b16 %v528
    %v911 = vunpack.c.l.b16 %v529
    %v912 = vunpack.c.h.b16 %v529
    %v913 = vunpack.c.l.b16 %v530
    %v914 = vunpack.c.h.b16 %v530
    %v915 = vunpack.c.l.b16 %v531
    %v916 = vunpack.c.h.b16 %v531
    %v917 = vunpack.c.l.b16 %v532
    %v918 = vunpack.c.h.b16 %v532
    %v919 = vunpack.c.l.b16 %v533
    %v920 = vunpack.c.h.b16 %v533
    %v921 = vunpack.c.l.b16 %v534
    %v922 = vunpack.c.h.b16 %v534
    %v923 = vunpack.c.l.b16 %v535
    %v924 = vunpack.c.h.b16 %v535
    %v925 = vunpack.c.l.b16 %v536
    %v926 = vunpack.c.h.b16 %v536
    %v927 = vunpack.c.l.b16 %v537
    %v928 = vunpack.c.h.b16 %v537
    %v929 = vunpack.c.l.b16 %v538
    %v930 = vunpack.c.h.b16 %v538
    %v931 = vunpack.c.l.b16 %v539
    %v932 = vunpack.c.h.b16 %v539
    %v933 = vunpack.c.l.b16 %v540
    %v934 = vunpack.c.h.b16 %v540
    %v935 = vunpack.c.l.b16 %v541
    %v936 = vunpack.c.h.b16 %v541
    %v937 = vunpack.c.l.b16 %v542
    %v938 = vunpack.c.h.b16 %v542
    %v939 = vpack.c.b16 %v685, %v683
    %v940 = vpack.c.b16 %v686, %v684
    %v941 = vpack.c.b16 %v689, %v687
    %v942 = vpack.c.b16 %v690, %v688
    %v943 = vpack.c.b16 %v693, %v691
    %v944 = vpack.c.b16 %v694, %v692
    %v945 = vpack.c.b16 %v697, %v695
    %v946 = vpack.c.b16 %v698, %v696
    %v947 = vpack.c.b16 %v701, %v699
    %v948 = vpack.c.b16 %v702, %v700
    %v949 = vpack.c.b16 %v705, %v703
    %v950 = vpack.c.b16 %v706, %v704
    %v951 = vpack.c.b16 %v709, %v707
    %v952 = vpack.c.b16 %v710, %v708
    %v953 = vpack.c.b16 %v713, %v711
    %v954 = vpack.c.b16 %v714, %v712
    %v955 = vpack.c.b16 %v717, %v715
    %v956 = vpack.c.b16 %v718, %v716
    %v957 = vpack.c.b16 %v721, %v719
    %v958 = vpack.c.b16 %v722, %v720
    %v959 = vpack.c.b16 %v725, %v723
    %v960 = vpack.c.b16 %v726, %v724
    %v961 = vpack.c.b16 %v729, %v727
    %v962 = vpack.c.b16 %v730, %v728
    %v963 = vpack.c.b16 %v733, %v731
    %v964 = vpack.c.b16 %v734, %v732
    %v965 = vpack.c.b16 %v737, %v735
    %v966 = vpack.c.b16 %v738, %v736
    %v967 = vpack.c.b16 %v741, %v739
    %v968 = vpack.c.b16 %v742, %v740
    %v969 = vpack.c.b16 %v745, %v743
    %v970 = vpack.c.b16 %v746, %v744
    %v971 = vpack.c.b16 %v749, %v747
    %v972 = vpack.c.b16 %v750, %v748
    %v973 = vpack.c.b16 %v753, %v751
    %v974 = vpack.c.b16 %v754, %v752
    %v975 = vpack.c.b16 %v757, %v755
    %v976 = vpack.c.b16 %v758, %v756
    %v977 = vpack.c.b16 %v761, %v759
    %v978 = vpack.c.b16 %v762, %v760
    %v979 = vpack.c.b16 %v765, %v763
    %v980 = vpack.c.b16 %v766, %v764
    %v981 = vpack.c.b16 %v769, %v767
    %v982 = vpack.c.b16 %v770, %v768
    %v983 = vpack.c.b16 %v773, %v771
    %v984 = vpack.c.b16 %v774, %v772
    %v985 = vpack.c.b16 %v777, %v775
    %v986 = vpack.c.b16 %v778, %v776
    %v987 = vpack.c.b16 %v781, %v779
    %v988 = vpack.c.b16 %v782, %v780
    %v989 = vpack.c.b16 %v785, %v783
    %v990 = vpack.c.b16 %v786, %v784
    %v991 = vpack.c.b16 %v789, %v787
    %v992 = vpack.c.b16 %v790, %v788
    %v993 = vpack.c.b16 %v793, %v791
    %v994 = vpack.c.b16 %v794, %v792
    %v995 = vpack.c.b16 %v797, %v795
    %v996 = vpack.c.b16 %v798, %v796
    %v997 = vpack.c.b16 %v801, %v799
    %v998 = vpack.c.b16 %v802, %v800
    %v999 = vpack.c.b16 %v805, %v803
    %v1000 = vpack.c.b16 %v806, %v804
    %v1001 = vpack.c.b16 %v809, %v807
    %v1002 = vpack.c.b16 %v810, %v808
    %v1003 = vpack.c.b16 %v813, %v811
    %v1004 = vpack.c.b16 %v814, %v812
    %v1005 = vpack.c.b16 %v817, %v815
    %v1006 = vpack.c.b16 %v818, %v816
    %v1007 = vpack.c.b16 %v821, %v819
    %v1008 = vpack.c.b16 %v822, %v820
    %v1009 = vpack.c.b16 %v825, %v823
    %v1010 = vpack.c.b16 %v826, %v824
    %v1011 = vpack.c.b16 %v829, %v827
    %v1012 = vpack.c.b16 %v830, %v828
    %v1013 = vpack.c.b16 %v833, %v831
    %v1014 = vpack.c.b16 %v834, %v832
    %v1015 = vpack.c.b16 %v837, %v835
    %v1016 = vpack.c.b16 %v838, %v836
    %v1017 = vpack.c.b16 %v841, %v839
    %v1018 = vpack.c.b16 %v842, %v840
    %v1019 = vpack.c.b16 %v845, %v843
    %v1020 = vpack.c.b16 %v846, %v844
    %v1021 = vpack.c.b16 %v849, %v847
    %v1022 = vpack.c.b16 %v850, %v848
    %v1023 = vpack.c.b16 %v853, %v851
    %v1024 = vpack.c.b16 %v854, %v852
    %v1025 = vpack.c.b16 %v857, %v855
    %v1026 = vpack.c.b16 %v858, %v856
    %v1027 = vpack.c.b16 %v861, %v859
    %v1028 = vpack.c.b16 %v862, %v860
    %v1029 = vpack.c.b16 %v865, %v863
    %v1030 = vpack.c.b16 %v866, %v864
    %v1031 = vpack.c.b16 %v869, %v867
    %v1032 = vpack.c.b16 %v870, %v868
    %v1033 = vpack.c.b16 %v873, %v871
    %v1034 = vpack.c.b16 %v874, %v872
    %v1035 = vpack.c.b16 %v877, %v875
    %v1036 = vpack.c.b16 %v878, %v876
    %v1037 = vpack.c.b16 %v881, %v879
    %v1038 = vpack.c.b16 %v882, %v880
    %v1039 = vpack.c.b16 %v885, %v883
    %v1040 = vpack.c.b16 %v886, %v884
    %v1041 = vpack.c.b16 %v889, %v887
    %v1042 = vpack.c.b16 %v890, %v888
    %v1043 = vpack.c.b16 %v893, %v891
    %v1044 = vpack.c.b16 %v894, %v892
    %v1045 = vpack.c.b16 %v897, %v895
    %v1046 = vpack.c.b16 %v898, %v896
    %v1047 = vpack.c.b16 %v901, %v899
    %v1048 = vpack.c.b16 %v902, %v900
    %v1049 = vpack.c.b16 %v905, %v903
    %v1050 = vpack.c.b16 %v906, %v904
    %v1051 = vpack.c.b16 %v909, %v907
    %v1052 = vpack.c.b16 %v910, %v908
    %v1053 = vpack.c.b16 %v913, %v911
    %v1054 = vpack.c.b16 %v914, %v912
    %v1055 = vpack.c.b16 %v917, %v915
    %v1056 = vpack.c.b16 %v918, %v916
    %v1057 = vpack.c.b16 %v921, %v919
    %v1058 = vpack.c.b16 %v922, %v920
    %v1059 = vpack.c.b16 %v925, %v923
    %v1060 = vpack.c.b16 %v926, %v924
    %v1061 = vpack.c.b16 %v929, %v927
    %v1062 = vpack.c.b16 %v930, %v928
    %v1063 = vpack.c.b16 %v933, %v931
    %v1064 = vpack.c.b16 %v934, %v932
    %v1065 = vpack.c.b16 %v937, %v935
    %v1066 = vpack.c.b16 %v938, %v936
    %1195 = vmatprep.subr.bf16.mxu0 %v940
    %1196 = vmatpush1.bf16.msra.mxu0 %v939
    %1197 = vmatprep.subr.bf16.mxu0 %v942
    %1198 = vmatpush1.bf16.msra.mxu0 %v941
    %1199 = vmatprep.subr.bf16.mxu0 %v944
    %1200 = vmatpush1.bf16.msra.mxu0 %v943
    %1201 = vmatprep.subr.bf16.mxu0 %v946
    %1202 = vmatpush1.bf16.msra.mxu0 %v945
    %1203 = vmatprep.subr.bf16.mxu0 %v948
    %1204 = vmatpush1.bf16.msra.mxu0 %v947
    %1205 = vmatprep.subr.bf16.mxu0 %v950
    %1206 = vmatpush1.bf16.msra.mxu0 %v949
    %1207 = vmatprep.subr.bf16.mxu0 %v952
    %1208 = vmatpush1.bf16.msra.mxu0 %v951
    %1209 = vmatprep.subr.bf16.mxu0 %v954
    %1210 = vmatpush1.bf16.msra.mxu0 %v953
    %1211 = vmatprep.subr.bf16.mxu0 %v956
    %1212 = vmatpush1.bf16.msra.mxu0 %v955
    %1213 = vmatprep.subr.bf16.mxu0 %v958
    %1214 = vmatpush1.bf16.msra.mxu0 %v957
    %1215 = vmatprep.subr.bf16.mxu0 %v960
    %1216 = vmatpush1.bf16.msra.mxu0 %v959
    %1217 = vmatprep.subr.bf16.mxu0 %v962
    %1218 = vmatpush1.bf16.msra.mxu0 %v961
    %1219 = vmatprep.subr.bf16.mxu0 %v964
    %1220 = vmatpush1.bf16.msra.mxu0 %v963
    %1221 = vmatprep.subr.bf16.mxu0 %v966
    %1222 = vmatpush1.bf16.msra.mxu0 %v965
    %1223 = vmatprep.subr.bf16.mxu0 %v968
    %1224 = vmatpush1.bf16.msra.mxu0 %v967
    %1225 = vmatprep.subr.bf16.mxu0 %v970
    %1226 = vmatpush1.bf16.msra.mxu0 %v969
    %1227 = vmatprep.mubr.bf16.mxu0 %v408
    %1228 = vmatmul.mubr.bf16.gmra.mrb[0].mxu0 %v407
    %v1229 = vpop.f32.mrb[0].mxu0
    %v1230 = vadd.f32 %v548, %v1229
    %v1231 = vpop.f32.mrb[0].mxu0
    %v1232 = vadd.f32 %v552, %v1231
    %v1233 = vpop.f32.mrb[0].mxu0
    %v1234 = vpop.f32.mrb[0].mxu0
    %1235 = vdwg.mxu0
    %1236 = vmatprep.subr.bf16.mxu0 %v972
    %1237 = vmatpush1.bf16.msra.mxu0 %v971
    %1238 = vmatprep.subr.bf16.mxu0 %v974
    %1239 = vmatpush1.bf16.msra.mxu0 %v973
    %1240 = vmatprep.subr.bf16.mxu0 %v976
    %1241 = vmatpush1.bf16.msra.mxu0 %v975
    %1242 = vmatprep.subr.bf16.mxu0 %v978
    %1243 = vmatpush1.bf16.msra.mxu0 %v977
    %1244 = vmatprep.subr.bf16.mxu0 %v980
    %1245 = vmatpush1.bf16.msra.mxu0 %v979
    %1246 = vmatprep.subr.bf16.mxu0 %v982
    %1247 = vmatpush1.bf16.msra.mxu0 %v981
    %1248 = vmatprep.subr.bf16.mxu0 %v984
    %1249 = vmatpush1.bf16.msra.mxu0 %v983
    %1250 = vmatprep.subr.bf16.mxu0 %v986
    %1251 = vmatpush1.bf16.msra.mxu0 %v985
    %1252 = vmatprep.subr.bf16.mxu0 %v988
    %1253 = vmatpush1.bf16.msra.mxu0 %v987
    %1254 = vmatprep.subr.bf16.mxu0 %v990
    %1255 = vmatpush1.bf16.msra.mxu0 %v989
    %1256 = vmatprep.subr.bf16.mxu0 %v992
    %1257 = vmatpush1.bf16.msra.mxu0 %v991
    %1258 = vmatprep.subr.bf16.mxu0 %v994
    %1259 = vmatpush1.bf16.msra.mxu0 %v993
    %1260 = vmatprep.subr.bf16.mxu0 %v996
    %1261 = vmatpush1.bf16.msra.mxu0 %v995
    %1262 = vmatprep.subr.bf16.mxu0 %v998
    %1263 = vmatpush1.bf16.msra.mxu0 %v997
    %1264 = vmatprep.subr.bf16.mxu0 %v1000
    %1265 = vmatpush1.bf16.msra.mxu0 %v999
    %1266 = vmatprep.subr.bf16.mxu0 %v1002
    %1267 = vmatpush1.bf16.msra.mxu0 %v1001
    %1268 = vmatprep.mubr.bf16.mxu0 %v410
    %1269 = vmatmul.mubr.bf16.gmra.mrb[0].mxu0 %v409
    %v1270 = vpop.f32.mrb[0].mxu0
    %v1271 = vadd.f32 %v1230, %v1270
    %v1272 = vpop.f32.mrb[0].mxu0
    %v1273 = vadd.f32 %v1232, %v1272
    %v1274 = vpop.f32.mrb[0].mxu0
    %v1275 = vpop.f32.mrb[0].mxu0
    %1276 = vdwg.mxu0
    %1277 = vmatprep.subr.bf16.mxu0 %v1004
    %1278 = vmatpush1.bf16.msra.mxu0 %v1003
    %1279 = vmatprep.subr.bf16.mxu0 %v1006
    %1280 = vmatpush1.bf16.msra.mxu0 %v1005
    %1281 = vmatprep.subr.bf16.mxu0 %v1008
    %1282 = vmatpush1.bf16.msra.mxu0 %v1007
    %1283 = vmatprep.subr.bf16.mxu0 %v1010
    %1284 = vmatpush1.bf16.msra.mxu0 %v1009
    %1285 = vmatprep.subr.bf16.mxu0 %v1012
    %1286 = vmatpush1.bf16.msra.mxu0 %v1011
    %1287 = vmatprep.subr.bf16.mxu0 %v1014
    %1288 = vmatpush1.bf16.msra.mxu0 %v1013
    %1289 = vmatprep.subr.bf16.mxu0 %v1016
    %1290 = vmatpush1.bf16.msra.mxu0 %v1015
    %1291 = vmatprep.subr.bf16.mxu0 %v1018
    %1292 = vmatpush1.bf16.msra.mxu0 %v1017
    %1293 = vmatprep.subr.bf16.mxu0 %v1020
    %1294 = vmatpush1.bf16.msra.mxu0 %v1019
    %1295 = vmatprep.subr.bf16.mxu0 %v1022
    %1296 = vmatpush1.bf16.msra.mxu0 %v1021
    %1297 = vmatprep.subr.bf16.mxu0 %v1024
    %1298 = vmatpush1.bf16.msra.mxu0 %v1023
    %1299 = vmatprep.subr.bf16.mxu0 %v1026
    %1300 = vmatpush1.bf16.msra.mxu0 %v1025
    %1301 = vmatprep.subr.bf16.mxu0 %v1028
    %1302 = vmatpush1.bf16.msra.mxu0 %v1027
    %1303 = vmatprep.subr.bf16.mxu0 %v1030
    %1304 = vmatpush1.bf16.msra.mxu0 %v1029
    %1305 = vmatprep.subr.bf16.mxu0 %v1032
    %1306 = vmatpush1.bf16.msra.mxu0 %v1031
    %1307 = vmatprep.subr.bf16.mxu0 %v1034
    %1308 = vmatpush1.bf16.msra.mxu0 %v1033
    %1309 = vmatprep.mubr.bf16.mxu0 %v412
    %1310 = vmatmul.mubr.bf16.gmra.mrb[0].mxu0 %v411
    %v1311 = vpop.f32.mrb[0].mxu0
    %v1312 = vadd.f32 %v1271, %v1311
    %v1313 = vpop.f32.mrb[0].mxu0
    %v1314 = vadd.f32 %v1273, %v1313
    %v1315 = vpop.f32.mrb[0].mxu0
    %v1316 = vpop.f32.mrb[0].mxu0
    %1317 = vdwg.mxu0
    %1318 = vmatprep.subr.bf16.mxu0 %v1036
    %1319 = vmatpush1.bf16.msra.mxu0 %v1035
    %1320 = vmatprep.subr.bf16.mxu0 %v1038
    %1321 = vmatpush1.bf16.msra.mxu0 %v1037
    %1322 = vmatprep.subr.bf16.mxu0 %v1040
    %1323 = vmatpush1.bf16.msra.mxu0 %v1039
    %1324 = vmatprep.subr.bf16.mxu0 %v1042
    %1325 = vmatpush1.bf16.msra.mxu0 %v1041
    %1326 = vmatprep.subr.bf16.mxu0 %v1044
    %1327 = vmatpush1.bf16.msra.mxu0 %v1043
    %1328 = vmatprep.subr.bf16.mxu0 %v1046
    %1329 = vmatpush1.bf16.msra.mxu0 %v1045
    %1330 = vmatprep.subr.bf16.mxu0 %v1048
    %1331 = vmatpush1.bf16.msra.mxu0 %v1047
    %1332 = vmatprep.subr.bf16.mxu0 %v1050
    %1333 = vmatpush1.bf16.msra.mxu0 %v1049
    %1334 = vmatprep.subr.bf16.mxu0 %v1052
    %1335 = vmatpush1.bf16.msra.mxu0 %v1051
    %1336 = vmatprep.subr.bf16.mxu0 %v1054
    %1337 = vmatpush1.bf16.msra.mxu0 %v1053
    %1338 = vmatprep.subr.bf16.mxu0 %v1056
    %1339 = vmatpush1.bf16.msra.mxu0 %v1055
    %1340 = vmatprep.subr.bf16.mxu0 %v1058
    %1341 = vmatpush1.bf16.msra.mxu0 %v1057
    %1342 = vmatprep.subr.bf16.mxu0 %v1060
    %1343 = vmatpush1.bf16.msra.mxu0 %v1059
    %1344 = vmatprep.subr.bf16.mxu0 %v1062
    %1345 = vmatpush1.bf16.msra.mxu0 %v1061
    %1346 = vmatprep.subr.bf16.mxu0 %v1064
    %1347 = vmatpush1.bf16.msra.mxu0 %v1063
    %1348 = vmatprep.subr.bf16.mxu0 %v1066
    %1349 = vmatpush1.bf16.msra.mxu0 %v1065
    %1350 = vmatprep.mubr.bf16.mxu0 %v414
    %1351 = vmatmul.mubr.bf16.gmra.mrb[0].mxu0 %v413
    %v1352 = vpop.f32.mrb[0].mxu0
    %v1353 = vadd.f32 %v1312, %v1352
    %v1354 = vpop.f32.mrb[0].mxu0
    %v1355 = vadd.f32 %v1314, %v1354
    %v1356 = vpop.f32.mrb[0].mxu0
    %v1357 = vpop.f32.mrb[0].mxu0
    %1358 = vdwg.mxu0
    %v1359 = vmax.f32 %v1353, 0.0
    %v1360 = vmax.f32 %v1355, 0.0
    %v1361 = vpack.c.bf16 %v1359, %v1359
    %v1362 = vpack.c.bf16 %v1360, %v1360
    %v1363 = vld [vmem:[#allocation10] sm:$0xf]
    %v1364 = vld [vmem:[#allocation10 + $0x4] sm:$0xf]
    %v1365 = vld [vmem:[#allocation10 + $0x8] sm:$0xf]
    %v1366 = vld [vmem:[#allocation10 + $0xc] sm:$0xf]
    %v1367 = vld [vmem:[#allocation10 + $0x10] sm:$0xf]
    %v1368 = vld [vmem:[#allocation10 + $0x14] sm:$0xf]
    %v1369 = vld [vmem:[#allocation10 + $0x18] sm:$0xf]
    %v1370 = vld [vmem:[#allocation10 + $0x1c] sm:$0xf]
    %v1371 = vld [vmem:[#allocation10 + $0x20] sm:$0xf]
    %v1372 = vld [vmem:[#allocation10 + $0x24] sm:$0xf]
    %v1373 = vld [vmem:[#allocation10 + $0x28] sm:$0xf]
    %v1374 = vld [vmem:[#allocation10 + $0x2c] sm:$0xf]
    %v1375 = vld [vmem:[#allocation10 + $0x30] sm:$0xf]
    %v1376 = vld [vmem:[#allocation10 + $0x34] sm:$0xf]
    %v1377 = vld [vmem:[#allocation10 + $0x38] sm:$0xf]
    %v1378 = vld [vmem:[#allocation10 + $0x3c] sm:$0xf]
    %v1379 = vld [vmem:[#allocation10 + $0x40] sm:$0xf]
    %v1380 = vld [vmem:[#allocation10 + $0x44] sm:$0xf]
    %v1381 = vld [vmem:[#allocation10 + $0x48] sm:$0xf]
    %v1382 = vld [vmem:[#allocation10 + $0x4c] sm:$0xf]
    %v1383 = vld [vmem:[#allocation10 + $0x50] sm:$0xf]
    %v1384 = vld [vmem:[#allocation10 + $0x54] sm:$0xf]
    %v1385 = vld [vmem:[#allocation10 + $0x58] sm:$0xf]
    %v1386 = vld [vmem:[#allocation10 + $0x5c] sm:$0xf]
    %v1387 = vld [vmem:[#allocation10 + $0x60] sm:$0xf]
    %v1388 = vld [vmem:[#allocation10 + $0x64] sm:$0xf]
    %v1389 = vld [vmem:[#allocation10 + $0x68] sm:$0xf]
    %v1390 = vld [vmem:[#allocation10 + $0x6c] sm:$0xf]
    %v1391 = vld [vmem:[#allocation10 + $0x70] sm:$0xf]
    %v1392 = vld [vmem:[#allocation10 + $0x74] sm:$0xf]
    %v1393 = vld [vmem:[#allocation10 + $0x78] sm:$0xf]
    %v1394 = vld [vmem:[#allocation10 + $0x7c] sm:$0xf]
    %v1395 = vld [vmem:[%s6] sm:$0x1]
    %v1397 = vlaneseq
    %v1398 = vshrl.u32 %v1397, 7
    %v1399 = vsub.s32 0, %v1398
    %v1400 = vrot.slane %v1395, %v1399
    %v1434 = vunpack.c.l.b16 %v1363
    %v1435 = vunpack.c.l.b16 %v1364
    %v1436 = vunpack.c.l.b16 %v1365
    %v1437 = vunpack.c.l.b16 %v1366
    %v1438 = vunpack.c.l.b16 %v1367
    %v1439 = vunpack.c.l.b16 %v1368
    %v1440 = vunpack.c.l.b16 %v1369
    %v1441 = vunpack.c.l.b16 %v1370
    %v1442 = vunpack.c.l.b16 %v1371
    %v1443 = vunpack.c.l.b16 %v1372
    %v1444 = vunpack.c.l.b16 %v1373
    %v1445 = vunpack.c.l.b16 %v1374
    %v1446 = vunpack.c.l.b16 %v1375
    %v1447 = vunpack.c.l.b16 %v1376
    %v1448 = vunpack.c.l.b16 %v1377
    %v1449 = vunpack.c.l.b16 %v1378
    %v1450 = vunpack.c.l.b16 %v1379
    %v1451 = vunpack.c.l.b16 %v1380
    %v1452 = vunpack.c.l.b16 %v1381
    %v1453 = vunpack.c.l.b16 %v1382
    %v1454 = vunpack.c.l.b16 %v1383
    %v1455 = vunpack.c.l.b16 %v1384
    %v1456 = vunpack.c.l.b16 %v1385
    %v1457 = vunpack.c.l.b16 %v1386
    %v1458 = vunpack.c.l.b16 %v1387
    %v1459 = vunpack.c.l.b16 %v1388
    %v1460 = vunpack.c.l.b16 %v1389
    %v1461 = vunpack.c.l.b16 %v1390
    %v1462 = vunpack.c.l.b16 %v1391
    %v1463 = vunpack.c.l.b16 %v1392
    %v1464 = vunpack.c.l.b16 %v1393
    %v1465 = vunpack.c.l.b16 %v1394
    %v1466 = vpack.c.b16 %v1435, %v1434
    %v1467 = vpack.c.b16 %v1437, %v1436
    %v1468 = vpack.c.b16 %v1439, %v1438
    %v1469 = vpack.c.b16 %v1441, %v1440
    %v1470 = vpack.c.b16 %v1443, %v1442
    %v1471 = vpack.c.b16 %v1445, %v1444
    %v1472 = vpack.c.b16 %v1447, %v1446
    %v1473 = vpack.c.b16 %v1449, %v1448
    %v1474 = vpack.c.b16 %v1451, %v1450
    %v1475 = vpack.c.b16 %v1453, %v1452
    %v1476 = vpack.c.b16 %v1455, %v1454
    %v1477 = vpack.c.b16 %v1457, %v1456
    %v1478 = vpack.c.b16 %v1459, %v1458
    %v1479 = vpack.c.b16 %v1461, %v1460
    %v1480 = vpack.c.b16 %v1463, %v1462
    %v1481 = vpack.c.b16 %v1465, %v1464
    %1498 = vmatprep.subr.bf16.mxu0 0
    %1499 = vmatpush1.bf16.msra.mxu0 %v1466
    %1500 = vmatprep.subr.bf16.mxu0 0
    %1501 = vmatpush1.bf16.msra.mxu0 %v1467
    %1502 = vmatprep.subr.bf16.mxu0 0
    %1503 = vmatpush1.bf16.msra.mxu0 %v1468
    %1504 = vmatprep.subr.bf16.mxu0 0
    %1505 = vmatpush1.bf16.msra.mxu0 %v1469
    %1506 = vmatprep.subr.bf16.mxu0 0
    %1507 = vmatpush1.bf16.msra.mxu0 %v1470
    %1508 = vmatprep.subr.bf16.mxu0 0
    %1509 = vmatpush1.bf16.msra.mxu0 %v1471
    %1510 = vmatprep.subr.bf16.mxu0 0
    %1511 = vmatpush1.bf16.msra.mxu0 %v1472
    %1512 = vmatprep.subr.bf16.mxu0 0
    %1513 = vmatpush1.bf16.msra.mxu0 %v1473
    %1514 = vmatprep.subr.bf16.mxu0 0
    %1515 = vmatpush1.bf16.msra.mxu0 %v1474
    %1516 = vmatprep.subr.bf16.mxu0 0
    %1517 = vmatpush1.bf16.msra.mxu0 %v1475
    %1518 = vmatprep.subr.bf16.mxu0 0
    %1519 = vmatpush1.bf16.msra.mxu0 %v1476
    %1520 = vmatprep.subr.bf16.mxu0 0
    %1521 = vmatpush1.bf16.msra.mxu0 %v1477
    %1522 = vmatprep.subr.bf16.mxu0 0
    %1523 = vmatpush1.bf16.msra.mxu0 %v1478
    %1524 = vmatprep.subr.bf16.mxu0 0
    %1525 = vmatpush1.bf16.msra.mxu0 %v1479
    %1526 = vmatprep.subr.bf16.mxu0 0
    %1527 = vmatpush1.bf16.msra.mxu0 %v1480
    %1528 = vmatprep.subr.bf16.mxu0 0
    %1529 = vmatpush1.bf16.msra.mxu0 %v1481
    %1530 = vmatprep.mubr.bf16.mxu0 %v1362
    %1531 = vmatmul.mubr.bf16.gmra.mrb[0].mxu0 %v1361
    %v1532 = vpop.f32.mrb[0].mxu0
    %v1533 = vadd.f32 %v1400, %v1532
    %v1534 = vpop.f32.mrb[0].mxu0
    %v1535 = vpop.f32.mrb[0].mxu0
    %v1536 = vpop.f32.mrb[0].mxu0
    %1537 = vdwg.mxu0
    %1538 = vst [vmem:[#allocation11] sm:$0x3] %v1533
    // Predicated region
    $region50: #{tpu_custom_call.1} parent=1 // pred_check
      _
    $region51: #{tpu_custom_call.1} parent=1 // pred_check_branch
      %1540 = sbr.rel (0) target = $region53
    $region52: #{tpu_custom_call.1} parent=1 // pred_region
      %s1542 = ssub.s32 32, 32
      %1543 = vsyncadd [#allocation4], %s1542
      %s1545 = sshll.u32 [#allocation11], 4
      %s1546 = int_to_ptr.vmem [resolvable:$true] %s1545
      %1548 = dma.vmem_to_hbm [thread:$0]  %s1546, 32, %s7, [#allocation4]
    $region53: #{tpu_custom_call.1} parent=1 // pred_fallthru
      _
    // Predicated region
    $region54: #{tpu_custom_call.1} parent=1 // pred_check
      _
    $region55: #{tpu_custom_call.1} parent=1 // pred_check_branch
      %1550 = sbr.rel (0) target = $region57
    $region56: #{tpu_custom_call.1} parent=1 // pred_region
      %1551 = dma.done [#allocation4], 32
    $region57: #{tpu_custom_call.1} parent=1 // pred_fallthru
      _
    %1552 = vsyncpa [#allocation3], 1
    %1553 = vsyncpa [#allocation6], 1
    %1554 = vsyncpa [#allocation9], 1
    %1555 = vsyncpa [#allocation4], 1

</llo_original>
